<compile_context>
chip_gen: v5e
topology: v5e:2x2
jax: 0.10.0
libtpu: 0.0.40
codegen_flags: <defaults>
</compile_context>

<pallas_src>
import jax
import jax.numpy as jnp
from jax.experimental import pallas as pl
from jax.experimental.pallas import tpu as pltpu


def _make_classhead_kernel(compute_dtype):
    def kernel(x_ref, w_ref, b_ref, o_ref):
        # x_ref: (Cin, thw)    pixel tile in native NCHW layout (input dtype)
        # w_ref: (Cout_p, Cin) full weight, resident across the grid
        # b_ref: (Cout_p, 1)   f32 bias
        # o_ref: (Cout_p, thw) f32 output tile (lane-dense, thw % 128 == 0)
        x = x_ref[...].astype(compute_dtype)          # VPU cast in VMEM (free)
        acc = jnp.dot(w_ref[...], x, preferred_element_type=jnp.float32)
        o_ref[...] = (acc + b_ref[...]).astype(o_ref.dtype)
    return kernel


def _pick_thw(L, Cin, x_bytes, N, *, max_thw=8192,
              vmem_budget=32 * 1024 * 1024):
    """Pick a lane-dense pixel-tile width (multiple of 128).

    Big enough to amortize per-grid-step overhead, small enough that the
    double-buffered x tile + double-buffered (8, thw) f32 out tile fit the
    scoped-VMEM budget (conservative for v5e/v6e/v7x), with a nudge toward
    >= ~4 total grid steps so both v7x TensorCores have work.
    """
    L128 = pl.cdiv(L, 128) * 128
    thw = min(L128, max_thw)

    # VMEM cap: 2x input tile + 2x output tile must stay under ~60% of budget.
    bytes_per_col = 2 * Cin * x_bytes + 2 * 8 * 4
    cap = max(128, (int(vmem_budget * 0.6) // bytes_per_col) // 128 * 128)
    thw = max(128, min(thw, cap))

    # Megacore: prefer >= 4 total steps, but never shrink below 1024 columns
    # (per-step overhead would start to dominate again).
    if N * pl.cdiv(L, thw) < 4:
        tiles_per_batch = max(1, -(-4 // N))
        thw_steps = max(1024, pl.cdiv(pl.cdiv(L128, tiles_per_batch), 128) * 128)
        thw = max(128, min(thw, thw_steps))
    return thw


def class_head_forward(x_nchw, w, b, num_anchors, *, max_thw=8192,
                       compute_dtype=jnp.bfloat16):
    """x_nchw: (N, Cin, H, W); w: Conv2d weight (Cout, Cin, 1, 1) or (Cout, Cin);
    b: (Cout,).  Returns (N, H*W*num_anchors, 2) in f32 (ClassHead.forward)."""
    N, Cin, H, W = x_nchw.shape
    if w.ndim == 4:                       # (Cout, Cin, 1, 1) -> (Cout, Cin)
        w = w.reshape(w.shape[0], w.shape[1])
    Cout = w.shape[0]
    assert Cout == num_anchors * 2
    L = H * W

    # Pad Cout to a full 8-row sublane tile (weight/bias are tiny; the padded
    # rows are zero and are sliced off after the call).
    Cout_p = max(8, pl.cdiv(Cout, 8) * 8)
    w_p = jnp.zeros((Cout_p, Cin), compute_dtype).at[:Cout].set(
        w.astype(compute_dtype))
    b_p = jnp.zeros((Cout_p, 1), jnp.float32).at[:Cout, 0].set(
        b.astype(jnp.float32))

    # Free reshape (NCHW is contiguous as (N, Cin, H*W)); keep incoming dtype —
    # the kernel casts in VMEM, avoiding an extra HBM pass for the convert.
    x_ncl = x_nchw.reshape(N, Cin, L)
    x_bytes = x_ncl.dtype.itemsize

    thw = _pick_thw(L, Cin, x_bytes, N, max_thw=max_thw)
    grid = (N, pl.cdiv(L, thw))           # ragged last block handled by Pallas

    vmem_need = (2 * Cin * thw * x_bytes           # double-buffered x tile
                 + 2 * Cout_p * thw * 4            # double-buffered out tile
                 + Cout_p * Cin * w_p.dtype.itemsize
                 + Cout_p * 4)
    vmem_limit = min(max(int(vmem_need * 1.5) + (1 << 20), 16 << 20), 64 << 20)

    flops = 2 * N * L * Cout_p * Cin
    bytes_accessed = (N * Cin * L * x_bytes
                      + Cout_p * Cin * w_p.dtype.itemsize
                      + N * Cout_p * L * 4)

    out = pl.pallas_call(
        _make_classhead_kernel(compute_dtype),
        out_shape=jax.ShapeDtypeStruct((N, Cout_p, L), jnp.float32),
        grid_spec=pltpu.PrefetchScalarGridSpec(
            num_scalar_prefetch=0,
            grid=grid,
            in_specs=[
                # pixel tile in native NCHW layout; batch dim squeezed away
                pl.BlockSpec((None, Cin, thw), lambda n, j: (n, 0, j)),
                # full (padded) weight, resident across the grid
                pl.BlockSpec((Cout_p, Cin), lambda n, j: (0, 0)),
                # full (padded) bias
                pl.BlockSpec((Cout_p, 1), lambda n, j: (0, 0)),
            ],
            out_specs=pl.BlockSpec((None, Cout_p, thw), lambda n, j: (n, 0, j)),
        ),
        compiler_params=pltpu.CompilerParams(
            dimension_semantics=("parallel", "parallel"),
            vmem_limit_bytes=vmem_limit,
        ),
        cost_estimate=pl.CostEstimate(flops=flops, transcendentals=0,
                                      bytes_accessed=bytes_accessed),
    )(x_ncl, w_p, b_p)

    # Small output-side slice + transpose (Cout << Cin; fuses in XLA):
    # (N, Cout, HW) -> (N, HW, Cout) -> (N, HW*A, 2)
    # == permute(0, 2, 3, 1).view(N, -1, 2) of the NCHW conv output.
    # TODO(synk): if the downstream consumer can take (N, Cout, HW) directly,
    # drop this transpose to save one more pass over the (small) output.
    out = out[:, :Cout, :]
    return jnp.transpose(out, (0, 2, 1)).reshape(N, L * num_anchors, 2)


if __name__ == "__main__":
    # Small, deterministic setup.
    N, Cin, H, W = 2, 32, 16, 16
    num_anchors = 3
    Cout = num_anchors * 2

    key = jax.random.PRNGKey(0)
    kx, kw, kb = jax.random.split(key, 3)
    x = jax.random.normal(kx, (N, Cin, H, W), dtype=jnp.float32)
    # PyTorch Conv2d weight layout: (Cout, Cin, 1, 1)
    w = jax.random.normal(kw, (Cout, Cin, 1, 1), dtype=jnp.float32) * 0.05
    b = jax.random.normal(kb, (Cout,), dtype=jnp.float32) * 0.05

    out = class_head_forward(x, w, b, num_anchors)
    out = jax.block_until_ready(out)

    # Reference of the same math (bf16-cast operands, f32 accumulate).
    x_bf = x.astype(jnp.bfloat16).astype(jnp.float32)
    w_bf = w.reshape(Cout, Cin).astype(jnp.bfloat16).astype(jnp.float32)
    ref = jnp.einsum("nchw,oc->nhwo", x_bf, w_bf,
                     precision=jax.lax.Precision.HIGHEST) + b
    ref = ref.reshape(N, H * W * num_anchors, 2)

    assert out.shape == (N, H * W * num_anchors, 2)
    assert jnp.allclose(out, ref, atol=1e-3, rtol=1e-3)

    # Exercise the ragged-last-block path as well (H*W = 5*7 = 35, no pad).
    x2 = jax.random.normal(kx, (N, Cin, 5, 7), dtype=jnp.float32)
    out2 = jax.block_until_ready(class_head_forward(x2, w, b, num_anchors))
    x2_bf = x2.astype(jnp.bfloat16).astype(jnp.float32)
    ref2 = jnp.einsum("nchw,oc->nhwo", x2_bf, w_bf,
                      precision=jax.lax.Precision.HIGHEST) + b
    ref2 = ref2.reshape(N, 5 * 7 * num_anchors, 2)
    assert out2.shape == (N, 5 * 7 * num_anchors, 2)
    assert jnp.allclose(out2, ref2, atol=1e-3, rtol=1e-3)

    print("KERNEL_OK")
</pallas_src>

<mosaic_0001>
module attributes {stable_mosaic.version = 11 : i64} {
  func.func @kernel(%arg0: i32, %arg1: i32, %arg2: memref<1x32x256xf32, #tpu.memory_space<vmem>>, %arg3: memref<8x32xbf16, #tpu.memory_space<vmem>>, %arg4: memref<8x1xf32, #tpu.memory_space<vmem>>, %arg5: memref<1x8x256xf32, #tpu.memory_space<vmem>>) attributes {dimension_semantics = [#tpu.dimension_semantics<parallel>, #tpu.dimension_semantics<parallel>], iteration_bounds = array<i64: 2, 1>, scalar_prefetch = 0 : i64, scratch_operands = 0 : i64, tpu.core_type = #tpu.core_type<tc>, window_params = [{transform_indices = @transform_0, window_bounds = array<i64: 1, 32, 256>}, {pipeline_mode = #tpu.pipeline_mode<synchronous>, transform_indices = @transform_1, window_bounds = array<i64: 8, 32>}, {pipeline_mode = #tpu.pipeline_mode<synchronous>, transform_indices = @transform_2, window_bounds = array<i64: 8, 1>}, {transform_indices = @transform_3, window_bounds = array<i64: 1, 8, 256>}]} {
    %c0 = arith.constant 0 : index
    %c0_0 = arith.constant 0 : index
    %c0_1 = arith.constant 0 : index
    %0 = vector.load %arg2[%c0, %c0_0, %c0_1] : memref<1x32x256xf32, #tpu.memory_space<vmem>>, vector<1x32x256xf32>
    %1 = vector.shape_cast %0 : vector<1x32x256xf32> to vector<32x256xf32>
    %2 = arith.truncf %1 : vector<32x256xf32> to vector<32x256xbf16>
    %c0_2 = arith.constant 0 : index
    %c0_3 = arith.constant 0 : index
    %3 = vector.load %arg3[%c0_2, %c0_3] : memref<8x32xbf16, #tpu.memory_space<vmem>>, vector<8x32xbf16>
    %cst = arith.constant dense<0.000000e+00> : vector<8x256xf32>
    %4 = tpu.matmul %3, %2, %cst {dimension_numbers = #tpu.dot_dimension_numbers<[1], [0], [0], [1], [0, 0, 1, 1], [], []>} : vector<8x32xbf16>, vector<32x256xbf16>, vector<8x256xf32> -> vector<8x256xf32>
    %c0_4 = arith.constant 0 : index
    %c0_5 = arith.constant 0 : index
    %5 = vector.load %arg4[%c0_4, %c0_5] : memref<8x1xf32, #tpu.memory_space<vmem>>, vector<8x1xf32>
    %6 = vector.broadcast %5 : vector<8x1xf32> to vector<8x256xf32>
    %7 = arith.addf %4, %6 : vector<8x256xf32>
    %c0_6 = arith.constant 0 : index
    %c0_7 = arith.constant 0 : index
    %c0_8 = arith.constant 0 : index
    %8 = vector.load %arg5[%c0_6, %c0_7, %c0_8] : memref<1x8x256xf32, #tpu.memory_space<vmem>>, vector<1x8x256xf32>
    %9 = vector.shape_cast %8 : vector<1x8x256xf32> to vector<8x256xf32>
    %10 = vector.shape_cast %7 : vector<8x256xf32> to vector<1x8x256xf32>
    tpu.vector_store %arg5[%c0_6, %c0_7, %c0_8], %10 {strides = array<i32>} : memref<1x8x256xf32, #tpu.memory_space<vmem>>, vector<1x8x256xf32>,
    return
  }
  func.func @transform_0(%arg0: i32, %arg1: i32) -> (i32, i32, i32) {
    %c0_i32 = arith.constant 0 : i32
    %c0_i32_0 = arith.constant 0 : i32
    return %arg0, %c0_i32, %arg1 : i32, i32, i32
  }
  func.func @transform_1(%arg0: i32, %arg1: i32) -> (i32, i32) {
    %c0_i32 = arith.constant 0 : i32
    %c0_i32_0 = arith.constant 0 : i32
    %c0_i32_1 = arith.constant 0 : i32
    return %c0_i32, %c0_i32_0 : i32, i32
  }
  func.func @transform_2(%arg0: i32, %arg1: i32) -> (i32, i32) {
    %c0_i32 = arith.constant 0 : i32
    %c0_i32_0 = arith.constant 0 : i32
    %c0_i32_1 = arith.constant 0 : i32
    return %c0_i32, %c0_i32_0 : i32, i32
  }
  func.func @transform_3(%arg0: i32, %arg1: i32) -> (i32, i32, i32) {
    %c0_i32 = arith.constant 0 : i32
    %c0_i32_0 = arith.constant 0 : i32
    return %arg0, %c0_i32, %arg1 : i32, i32, i32
  }
}

</mosaic_0001>

<llo_original>
// kernel: tpu_custom_call.1
$region0: #{tpu_custom_call.1}
  #allocation0 [shape = 'u32[]', space=smem, size = 0x4, offset = 0x4, fixed_abs, tag = 'smem constant byte address 0x4 - core index']
  #allocation1 [shape = 'u32[72,128]{1,0:T(1,128)}', space=vmem, size = 0x9000, scoped, tag = 'internal scratch']
  %s0 = inlined_call_operand.hbm [shape: f32[2,32,256], index: 0, kind: input, shape index: {}]
  %s1 = inlined_call_operand.vmem [shape: bf16[8,32], index: 1, kind: input, shape index: {}]
  %s2 = inlined_call_operand.vmem [shape: f32[8,1], index: 2, kind: input, shape index: {}]
  %s3 = inlined_call_operand.hbm [shape: f32[2,8,256], index: 3, kind: output, shape index: {}]
  %s4 = sld [smem:[#allocation0]]
  $region49: #{tpu_custom_call.1} parent=0
    _
  %s6 = ssub.s32 1, %s4
  %s7 = scalar_select 0, %s6, %s4
  $region1: #{tpu_custom_call.1} parent=0
    #allocation2 [shape = 'u8[65536]{0}', space=vmem, size = 0x10000, scoped, tag = 'input window, operand 0']
    #allocation3 [shape = 's32[2]{0}', space=sflag, size = 0x8, scoped, tag = 'scoped memory for tpu_custom_call.1']
    #allocation4 [shape = 's32[2]{0}', space=sflag, size = 0x8, scoped, tag = 'scoped memory for tpu_custom_call.1']
    #allocation5 [shape = 'u8[16384]{0}', space=vmem, size = 0x4000, scoped, tag = 'output window, operand 0']
    %8 = vsyncpa [#allocation3], 0
    %s9 = scalar_lea.sflag [#allocation3], 1
    %10 = vsyncpa %s9, 0
    %11 = vsyncpa [#allocation4], 0
    %s12 = scalar_lea.sflag [#allocation4], 1
    %13 = vsyncpa %s12, 0
    loop: start=0, step=1, limit=4
    $region2: #{tpu_custom_call.1} parent=1 // loop_pre_header
      _
    $region3: #{tpu_custom_call.1} parent=1 // loop_header
      %s15 = sphi 0, %s19
      %p16 = scmp.ge.s32.totalorder %s15, 4
      %s22 = sphi 0, %s34
      %s23 = sphi 0, %s30
      %s24 = sphi 0, %s22
      %s25 = sphi 0, %s23
      %s26 = sphi 0, %s24
      %s27 = sphi 0, %s25
      %s39 = sphi 0, %s41
      %s42 = sphi 0, %s39
      %s43 = sphi 0, %s42
      %s59 = sphi 0, %s43
      %s63 = sphi 0, %s63
      %s65 = sphi 0, %s63
      %s66 = sphi 0, %s65
      %s80 = sphi 0, %s66
      %s84 = sphi 0, %s84
      %s86 = sphi 0, %s84
      %s87 = sphi 0, %s86
      %s101 = sphi 0, %s87
      %s109 = sphi 0, %s111
      %s112 = sphi 0, %s109
      %s113 = sphi 0, %s112
      %s129 = sphi 0, %s113
    $region4: #{tpu_custom_call.1} parent=1 // loop_header_branch
      %18 = sbr.rel (%p16) target = $region8
    $region5: #{tpu_custom_call.1} parent=1 // loop_body
      %s20 = ssub.s32 %s15, 1
      %s21 = ssub.s32 %s15, 2
      %s28 = sadd.s32 1, %s23
      %p29 = scmp.ge.s32.totalorder %s28, 1
      %s30 = scalar_select %p29, 0, %s28
      %s31 = sadd.s32 1, %s22
      %s32 = scalar_select %p29, %s31, %s22
      %p33 = scmp.ge.s32.totalorder %s32, 2
      %s34 = scalar_select %p33, 0, %s32
      %s35 = ssub.s32 %s22, %s34
      %s36 = ssub.s32 %s23, %s30
      %s37 = sor.u32 %s35, %s36
      %p38 = scmp.eq.s32.totalorder %s37, 0
      %s40 = sadd.s32 %s39, 1
      %s41 = scalar_select %p38, %s39, %s40
      %p44 = pneg %p38
      %p45 = scmp.eq.s32.totalorder %s15, 1
      %p46 = por %p44, %p45
      %p47 = scmp.ne.s32.totalorder %s39, %s42
      %p48 = scmp.eq.s32.totalorder %s15, 0
      %p49 = por %p47, %p48
      %p50 = scmp.ne.s32.totalorder %s39, %s42
      %p51 = scmp.eq.s32.totalorder %s20, 1
      %p52 = por %p50, %p51
      %p53 = scmp.ne.s32.totalorder %s42, %s43
      %p54 = scmp.eq.s32.totalorder %s20, 0
      %p55 = por %p53, %p54
      %p56 = scmp.ne.s32.totalorder %s42, %s43
      %p57 = scmp.eq.s32.totalorder %s21, 1
      %p58 = por %p56, %p57
      %p60 = scmp.ne.s32.totalorder %s43, %s59
      %p61 = scmp.eq.s32.totalorder %s21, 0
      %p62 = por %p60, %p61
      %s64 = sadd.s32 %s63, 1
      %p67 = scmp.eq.s32.totalorder %s15, 1
      %p68 = scmp.ne.s32.totalorder %s63, %s65
      %p69 = scmp.eq.s32.totalorder %s15, 0
      %p70 = por %p68, %p69
      %p71 = scmp.ne.s32.totalorder %s63, %s65
      %p72 = scmp.eq.s32.totalorder %s20, 1
      %p73 = por %p71, %p72
      %p74 = scmp.ne.s32.totalorder %s65, %s66
      %p75 = scmp.eq.s32.totalorder %s20, 0
      %p76 = por %p74, %p75
      %p77 = scmp.ne.s32.totalorder %s65, %s66
      %p78 = scmp.eq.s32.totalorder %s21, 1
      %p79 = por %p77, %p78
      %p81 = scmp.ne.s32.totalorder %s66, %s80
      %p82 = scmp.eq.s32.totalorder %s21, 0
      %p83 = por %p81, %p82
      %s85 = sadd.s32 %s84, 1
      %p88 = scmp.eq.s32.totalorder %s15, 1
      %p89 = scmp.ne.s32.totalorder %s84, %s86
      %p90 = scmp.eq.s32.totalorder %s15, 0
      %p91 = por %p89, %p90
      %p92 = scmp.ne.s32.totalorder %s84, %s86
      %p93 = scmp.eq.s32.totalorder %s20, 1
      %p94 = por %p92, %p93
      %p95 = scmp.ne.s32.totalorder %s86, %s87
      %p96 = scmp.eq.s32.totalorder %s20, 0
      %p97 = por %p95, %p96
      %p98 = scmp.ne.s32.totalorder %s86, %s87
      %p99 = scmp.eq.s32.totalorder %s21, 1
      %p100 = por %p98, %p99
      %p102 = scmp.ne.s32.totalorder %s87, %s101
      %p103 = scmp.eq.s32.totalorder %s21, 0
      %p104 = por %p102, %p103
      %s105 = ssub.s32 %s22, %s34
      %s106 = ssub.s32 %s23, %s30
      %s107 = sor.u32 %s105, %s106
      %p108 = scmp.eq.s32.totalorder %s107, 0
      %s110 = sadd.s32 %s109, 1
      %s111 = scalar_select %p108, %s109, %s110
      %p114 = pneg %p108
      %p115 = scmp.eq.s32.totalorder %s15, 1
      %p116 = por %p114, %p115
      %p117 = scmp.ne.s32.totalorder %s109, %s112
      %p118 = scmp.eq.s32.totalorder %s15, 0
      %p119 = por %p117, %p118
      %p120 = scmp.ne.s32.totalorder %s109, %s112
      %p121 = scmp.eq.s32.totalorder %s20, 1
      %p122 = por %p120, %p121
      %p123 = scmp.ne.s32.totalorder %s112, %s113
      %p124 = scmp.eq.s32.totalorder %s20, 0
      %p125 = por %p123, %p124
      %p126 = scmp.ne.s32.totalorder %s112, %s113
      %p127 = scmp.eq.s32.totalorder %s21, 1
      %p128 = por %p126, %p127
      %p130 = scmp.ne.s32.totalorder %s113, %s129
      %p131 = scmp.eq.s32.totalorder %s21, 0
      %p132 = por %p130, %p131
      %p133 = scmp.le.s32.totalorder 1, %s15
      %p134 = scmp.lt.s32.totalorder %s15, 3
      %p135 = pnand %p133, %p134
      %p136 = pneg %p135
      // Predicated region
      $region9: #{tpu_custom_call.1} parent=5 // pred_check
        _
      $region10: #{tpu_custom_call.1} parent=5 // pred_check_branch
        %138 = sbr.rel (%p135) target = $region12
      $region11: #{tpu_custom_call.1} parent=5 // pred_region
        %s139 = ssub.s32 %s15, 1
        // Predicated region
        $region13: #{tpu_custom_call.1} parent=11 // pred_check
          %p140 = pneg %p76
        $region14: #{tpu_custom_call.1} parent=11 // pred_check_branch
          %142 = sbr.rel (%p140) target = $region16
        $region15: #{tpu_custom_call.1} parent=11 // pred_region
          _
        $region16: #{tpu_custom_call.1} parent=11 // pred_fallthru
          _
        // Predicated region
        $region17: #{tpu_custom_call.1} parent=11 // pred_check
          %p143 = pneg %p97
        $region18: #{tpu_custom_call.1} parent=11 // pred_check_branch
          %145 = sbr.rel (%p143) target = $region20
        $region19: #{tpu_custom_call.1} parent=11 // pred_region
          _
        $region20: #{tpu_custom_call.1} parent=11 // pred_fallthru
          _
      $region12: #{tpu_custom_call.1} parent=5 // pred_fallthru
        _
      %p146 = scmp.lt.s32.totalorder %s15, 2
      // Predicated region
      $region21: #{tpu_custom_call.1} parent=5 // pred_check
        %p147 = pneg %p146
      $region22: #{tpu_custom_call.1} parent=5 // pred_check_branch
        %149 = sbr.rel (%p147) target = $region24
      $region23: #{tpu_custom_call.1} parent=5 // pred_region
        // Predicated region
        $region25: #{tpu_custom_call.1} parent=23 // pred_check
          %p150 = pneg %p49
        $region26: #{tpu_custom_call.1} parent=23 // pred_check_branch
          %152 = sbr.rel (%p150) target = $region28
        $region27: #{tpu_custom_call.1} parent=23 // pred_region
          %s153 = sand.u32 %s39, 1
          %s154 = scalar_lea.sflag [#allocation3], %s153
          %s155 = sand.u32 %s39, 1
          %s156 = smul.addr %s155, 64
          %s157 = scalar_lea.vmem [#allocation2], %s156
          %s158 = smul.u32 2, %s23
          %160 = vsyncadd %s154, 0
          %s161 = smul.addr %s22, 8
          %s162 = sadd.s32 %s158, %s161
          %s163 = smul.addr %s162, 8
          %s164 = scalar_lea.hbm %s0, %s163
          %s165 = sshll.u32 %s164, 4
          %s166 = int_to_ptr.hbm [resolvable:$true] %s165
          %s167 = sshll.u32 %s157, 4
          %s168 = int_to_ptr.vmem [resolvable:$true] %s167
          %173 = dma.hbm_to_vmem [thread:$0]  %s166, 1024, %s168, %s154, 256, 256, 16
        $region28: #{tpu_custom_call.1} parent=23 // pred_fallthru
          _
      $region24: #{tpu_custom_call.1} parent=5 // pred_fallthru
        _
      %p174 = scmp.le.s32.totalorder 1, %s15
      %p175 = scmp.lt.s32.totalorder %s15, 3
      %p176 = pnand %p174, %p175
      %p177 = pneg %p176
      // Predicated region
      $region29: #{tpu_custom_call.1} parent=5 // pred_check
        _
      $region30: #{tpu_custom_call.1} parent=5 // pred_check_branch
        %179 = sbr.rel (%p176) target = $region32
      $region31: #{tpu_custom_call.1} parent=5 // pred_region
        %s180 = ssub.s32 %s15, 1
        %s181 = sand.u32 %s42, 1
        %s182 = scalar_lea.sflag [#allocation3], %s181
        %s183 = sand.u32 %s42, 1
        %s184 = smul.addr %s183, 64
        %s185 = scalar_lea.vmem [#allocation2], %s184
        // Predicated region
        $region33: #{tpu_custom_call.1} parent=31 // pred_check
          %p186 = pneg %p55
        $region34: #{tpu_custom_call.1} parent=31 // pred_check_branch
          %188 = sbr.rel (%p186) target = $region36
        $region35: #{tpu_custom_call.1} parent=31 // pred_region
          %190 = dma.done %s182, 1024
        $region36: #{tpu_custom_call.1} parent=31 // pred_fallthru
          _
        %s191 = sand.u32 %s42, 1
        %s192 = scalar_lea.sflag [#allocation3], %s191
        %s193 = sand.u32 %s42, 1
        %s194 = smul.addr %s193, 64
        %s195 = scalar_lea.vmem [#allocation2], %s194
        %p196 = pneg %p55
        %p197 = pneg %p52
        %p198 = pneg %p76
        %p199 = pneg %p73
        %p200 = pneg %p97
        %p201 = pneg %p94
        %p202 = pneg %p125
        %p203 = pneg %p122
        %s204 = sand.u32 %s112, 1
        %s205 = scalar_lea.sflag [#allocation4], %s204
        %s206 = sand.u32 %s112, 1
        %s207 = smul.addr %s206, 16
        %s208 = scalar_lea.vmem [#allocation5], %s207
        %s209 = smul.u32 2, %s25
        %s210 = smul.u32 2, %s25
        %v212 = vld [vmem:[%s185] sm:$0xff]
        %v213 = vld [vmem:[%s185 + $0x8] sm:$0xff]
        %v214 = vld [vmem:[%s185 + $0x10] sm:$0xff]
        %v215 = vld [vmem:[%s185 + $0x18] sm:$0xff]
        %v216 = vld [vmem:[%s185 + $0x20] sm:$0xff]
        %v217 = vld [vmem:[%s185 + $0x28] sm:$0xff]
        %v218 = vld [vmem:[%s185 + $0x30] sm:$0xff]
        %v219 = vld [vmem:[%s185 + $0x38] sm:$0xff]
        %v220 = vpack.c.bf16 %v214, %v212
        %v221 = vpack.c.bf16 %v215, %v213
        %v222 = vpack.c.bf16 %v218, %v216
        %v223 = vpack.c.bf16 %v219, %v217
        %v224 = vld [vmem:[%s1] sm:$0xf]
        %v225 = vld [vmem:[%s2] sm:$0xff]
        %227 = vset.pattern.permute.xlu0 0
        %228 = vperm.xlu0 %227, %v225
        %v229 = vpop.permute.xlu0 %228
        %vm231 = vcmask 261120
        %v233 = vsel %vm231, %v224, 0
        %235 = vmatpush.bf16.msra.mxu0 0
        %236 = vmatpush.bf16.msra.mxu0 0
        %237 = vmatpush.bf16.msra.mxu0 0
        %238 = vmatpush.bf16.msra.mxu0 0
        %239 = vmatpush.bf16.msra.mxu0 0
        %240 = vmatpush.bf16.msra.mxu0 0
        %241 = vmatpush.bf16.msra.mxu0 %v222
        %242 = vmatpush.bf16.msra.mxu0 %v220
        %243 = vmatmul.bf16.gmra.mxu0 %v233
        %v244 = vpop.f32.mrf.mxu0
        %v245 = vadd.f32 %v229, %v244
        %v246 = vpop.f32.mrf.mxu0
        %247 = vdwg.mxu0
        %248 = vmatpush.bf16.msra.mxu0 0
        %249 = vmatpush.bf16.msra.mxu0 0
        %250 = vmatpush.bf16.msra.mxu0 0
        %251 = vmatpush.bf16.msra.mxu0 0
        %252 = vmatpush.bf16.msra.mxu0 0
        %253 = vmatpush.bf16.msra.mxu0 0
        %254 = vmatpush.bf16.msra.mxu0 %v223
        %255 = vmatpush.bf16.msra.mxu0 %v221
        %256 = vmatmul.bf16.gmra.mxu0 %v233
        %v257 = vpop.f32.mrf.mxu0
        %v258 = vadd.f32 %v229, %v257
        %v259 = vpop.f32.mrf.mxu0
        %260 = vdwg.mxu0
        %261 = vst [vmem:[%s208] sm:$0xff] %v245
        %262 = vst [vmem:[%s208 + $0x8] sm:$0xff] %v258
        %s263 = sand.u32 %s112, 1
        %s264 = scalar_lea.sflag [#allocation4], %s263
        %s265 = sand.u32 %s112, 1
        %s266 = smul.addr %s265, 16
        %s267 = scalar_lea.vmem [#allocation5], %s266
        // Predicated region
        $region37: #{tpu_custom_call.1} parent=31 // pred_check
          %p268 = pneg %p122
        $region38: #{tpu_custom_call.1} parent=31 // pred_check_branch
          %270 = sbr.rel (%p268) target = $region40
        $region39: #{tpu_custom_call.1} parent=31 // pred_region
          %s271 = smul.u32 2, %s25
          %273 = vsyncadd %s264, 0
          %s274 = smul.addr %s24, 2
          %s275 = sadd.s32 %s271, %s274
          %s276 = smul.addr %s275, 8
          %s277 = scalar_lea.hbm %s3, %s276
          %s279 = sshll.u32 %s267, 4
          %s280 = int_to_ptr.vmem [resolvable:$true] %s279
          %s281 = sshll.u32 %s277, 4
          %s282 = int_to_ptr.hbm [resolvable:$true] %s281
          %284 = dma.vmem_to_hbm [thread:$0]  %s280, 256, %s282, %s264
        $region40: #{tpu_custom_call.1} parent=31 // pred_fallthru
          _
      $region32: #{tpu_custom_call.1} parent=5 // pred_fallthru
        _
      %p285 = scmp.le.s32.totalorder 2, %s15
      // Predicated region
      $region41: #{tpu_custom_call.1} parent=5 // pred_check
        %p286 = pneg %p285
      $region42: #{tpu_custom_call.1} parent=5 // pred_check_branch
        %288 = sbr.rel (%p286) target = $region44
      $region43: #{tpu_custom_call.1} parent=5 // pred_region
        %s289 = ssub.s32 %s15, 2
        // Predicated region
        $region45: #{tpu_custom_call.1} parent=43 // pred_check
          %p290 = pneg %p128
        $region46: #{tpu_custom_call.1} parent=43 // pred_check_branch
          %292 = sbr.rel (%p290) target = $region48
        $region47: #{tpu_custom_call.1} parent=43 // pred_region
          %s293 = sand.u32 %s113, 1
          %s294 = scalar_lea.sflag [#allocation4], %s293
          %s295 = sand.u32 %s113, 1
          %s296 = smul.addr %s295, 16
          %s297 = scalar_lea.vmem [#allocation5], %s296
          %299 = dma.done %s294, 256
        $region48: #{tpu_custom_call.1} parent=43 // pred_fallthru
          _
      $region44: #{tpu_custom_call.1} parent=5 // pred_fallthru
        _
    $region6: #{tpu_custom_call.1} parent=1 // loop_footer
      %s19 = sadd.s32 1, %s15
    $region7: #{tpu_custom_call.1} parent=1 // loop_footer_branch
      %14 = sbr.rel target = $region3
    $region8: #{tpu_custom_call.1} parent=1 // loop_exit
      _
    %300 = vsyncpa [#allocation3], 1
    %s301 = scalar_lea.sflag [#allocation3], 1
    %302 = vsyncpa %s301, 1
    %303 = vsyncpa [#allocation4], 1
    %s304 = scalar_lea.sflag [#allocation4], 1
    %305 = vsyncpa %s304, 1

</llo_original>
